<compile_context>
chip_gen: v6e
topology: v6e:2x2x1
jax: 0.10.0
libtpu: 0.0.40
codegen_flags: <defaults>
</compile_context>

<pallas_src>
import functools
import math

import jax
import jax.numpy as jnp
from jax.experimental import pallas as pl
from jax.experimental.pallas import tpu as pltpu


def dm_kernel(x_ref, o_ref, *, nu):
    # x_ref: [bb, num_class + 1]  (flattened batch on sublanes, classes+omega on lanes)
    # o_ref: [bb, num_class]
    x = x_ref[...]
    c = o_ref.shape[-1]
    omega = x[:, c:c + 1]                                    # [bb, 1] static lane slice
    o_ref[...] = (x[:, :c] + (1.0 - nu) * omega).astype(o_ref.dtype)


def dm_forward(inputs, num_class, nu=0.9, *, block_b=2048):
    """DM.forward: inputs [..., num_class+1] -> outputs [..., num_class]."""
    k = inputs.shape[-1]
    assert k == num_class + 1, (inputs.shape, num_class)
    lead = inputs.shape[:-1]
    b = math.prod(lead) if lead else 1

    x2d = inputs.reshape(b, k)                 # contiguous view: no data movement
    bb = b if b <= block_b else block_b        # 2048 % 8 == 0 -> partial tail block is fine

    out2d = pl.pallas_call(
        functools.partial(dm_kernel, nu=float(nu)),
        out_shape=jax.ShapeDtypeStruct((b, num_class), inputs.dtype),
        grid=(pl.cdiv(b, bb),),
        in_specs=[pl.BlockSpec((bb, k), lambda i: (i, 0))],
        out_specs=pl.BlockSpec((bb, num_class), lambda i: (i, 0)),
        compiler_params=pltpu.CompilerParams(dimension_semantics=("parallel",)),
    )(x2d)
    return out2d.reshape(*lead, num_class)


def reference(inputs, num_class, nu=0.9):
    """Pure-JAX faithful translation of the PyTorch DM.forward (tile == broadcast)."""
    upper = (1.0 - nu) * inputs[..., -1:]
    return (inputs + upper)[..., :-1]


if __name__ == "__main__":
    num_class = 4     # per-class masses
    nu = 0.9

    key = jax.random.PRNGKey(0)
    k1, k2 = jax.random.split(key)

    # Case 1: plain batch of evidential-head outputs (per-class masses + omega).
    B = 8
    inputs = jax.random.uniform(k1, (B, num_class + 1), dtype=jnp.float32)
    out = jax.block_until_ready(dm_forward(inputs, num_class, nu))
    ref = reference(inputs, num_class, nu)
    assert out.shape == (B, num_class), out.shape
    assert jnp.allclose(out, ref, rtol=1e-6, atol=1e-6), (out, ref)

    # Case 2: extra leading dims (flattened inside the wrapper).
    inputs2 = jax.random.uniform(k2, (2, 8, num_class + 1), dtype=jnp.float32)
    out2 = jax.block_until_ready(dm_forward(inputs2, num_class, nu))
    ref2 = reference(inputs2, num_class, nu)
    assert out2.shape == (2, 8, num_class), out2.shape
    assert jnp.allclose(out2, ref2, rtol=1e-6, atol=1e-6), (out2, ref2)

    print("KERNEL_OK")
</pallas_src>

<mosaic_0001>
module attributes {stable_mosaic.version = 11 : i64} {
  func.func @dm_kernel(%arg0: i32, %arg1: memref<8x5xf32, #tpu.memory_space<vmem>>, %arg2: memref<8x4xf32, #tpu.memory_space<vmem>>) attributes {dimension_semantics = [#tpu.dimension_semantics<parallel>], iteration_bounds = array<i64: 1>, scalar_prefetch = 0 : i64, scratch_operands = 0 : i64, tpu.core_type = #tpu.core_type<tc>, window_params = [{transform_indices = @transform_0, window_bounds = array<i64: 8, 5>}, {transform_indices = @transform_1, window_bounds = array<i64: 8, 4>}]} {
    %c0 = arith.constant 0 : index
    %c0_0 = arith.constant 0 : index
    %0 = vector.load %arg1[%c0, %c0_0] : memref<8x5xf32, #tpu.memory_space<vmem>>, vector<8x5xf32>
    %1 = vector.extract_strided_slice %0 {offsets = [0, 4], sizes = [8, 1], strides = [1, 1]} : vector<8x5xf32> to vector<8x1xf32>
    %2 = vector.extract_strided_slice %0 {offsets = [0, 0], sizes = [8, 4], strides = [1, 1]} : vector<8x5xf32> to vector<8x4xf32>
    %cst = arith.constant 1.000000e-01 : f32
    %3 = vector.broadcast %cst : f32 to vector<8x1xf32>
    %4 = arith.mulf %3, %1 : vector<8x1xf32>
    %5 = vector.broadcast %4 : vector<8x1xf32> to vector<8x4xf32>
    %6 = arith.addf %2, %5 : vector<8x4xf32>
    %c0_1 = arith.constant 0 : index
    %c0_2 = arith.constant 0 : index
    %7 = vector.load %arg2[%c0_1, %c0_2] : memref<8x4xf32, #tpu.memory_space<vmem>>, vector<8x4xf32>
    tpu.vector_store %arg2[%c0_1, %c0_2], %6 {strides = array<i32>} : memref<8x4xf32, #tpu.memory_space<vmem>>, vector<8x4xf32>,
    return
  }
  func.func @transform_0(%arg0: i32) -> (i32, i32) {
    %c0_i32 = arith.constant 0 : i32
    %c0_i32_0 = arith.constant 0 : i32
    return %arg0, %c0_i32 : i32, i32
  }
  func.func @transform_1(%arg0: i32) -> (i32, i32) {
    %c0_i32 = arith.constant 0 : i32
    %c0_i32_0 = arith.constant 0 : i32
    return %arg0, %c0_i32 : i32, i32
  }
}

</mosaic_0001>

<llo_original>
// kernel: tpu_custom_call.1
$region0: #{tpu_custom_call.1}
  #allocation0 [shape = 'u32[]', space=smem, size = 0x4, offset = 0x4, fixed_abs, tag = 'smem constant byte address 0x4 - core index']
  #allocation1 [shape = 'u32[144,128]{1,0:T(1,128)}', space=vmem, size = 0x12000, scoped, tag = 'internal scratch']
  %s0 = inlined_call_operand.hbm [shape: f32[8,5], index: 0, kind: input, shape index: {}]
  %s1 = inlined_call_operand.vmem [shape: f32[8,4], index: 1, kind: output, shape index: {}]
  %s2 = sld [smem:[#allocation0]]
  $region18: #{tpu_custom_call.1} parent=0
    _
  %s4 = ssub.s32 1, %s2
  %s5 = scalar_select 0, %s4, %s2
  $region1: #{tpu_custom_call.1} parent=0
    #allocation2 [shape = 'u8[4096]{0}', space=vmem, size = 0x1000, scoped, tag = 'input window, operand 0, single buffered']
    #allocation3 [shape = 's32[1]{0}', space=sflag, size = 0x4, scoped, tag = 'scoped memory for tpu_custom_call.1']
    %6 = vsyncpa [#allocation3], 0
    // Predicated region
    $region2: #{tpu_custom_call.1} parent=1 // pred_check
      _
    $region3: #{tpu_custom_call.1} parent=1 // pred_check_branch
      %8 = sbr.rel (0) target = $region5
    $region4: #{tpu_custom_call.1} parent=1 // pred_region
      %s10 = ssub.s32 128, 128
      %11 = vsyncadd [#allocation3], %s10
      %s13 = sshll.u32 [#allocation2], 4
      %s14 = int_to_ptr.vmem [resolvable:$true] %s13
      %16 = dma.hbm_to_vmem [thread:$0]  %s0, 128, %s14, [#allocation3]
    $region5: #{tpu_custom_call.1} parent=1 // pred_fallthru
      _
    // Predicated region
    $region6: #{tpu_custom_call.1} parent=1 // pred_check
      _
    $region7: #{tpu_custom_call.1} parent=1 // pred_check_branch
      %18 = sbr.rel (0) target = $region9
    $region8: #{tpu_custom_call.1} parent=1 // pred_region
      %19 = dma.done [#allocation3], 128
    $region9: #{tpu_custom_call.1} parent=1 // pred_fallthru
      _
    %v20 = vld [vmem:[#allocation2] sm:$0xff]
    %v21 = vmul.f32 %v20, 0.1
    %23 = vset.pattern.permute.xlu0 4
    %24 = vperm.xlu0 %23, %v21
    %v25 = vpop.permute.xlu0 %24
    %v27 = vadd.f32 %v20, %v25
    %vm28 = vcmask 31744
    %29 = vst.msk [vmem:[%s1] sm:$0xff] %vm28, %v27
    // Predicated region
    $region10: #{tpu_custom_call.1} parent=1 // pred_check
      _
    $region11: #{tpu_custom_call.1} parent=1 // pred_check_branch
      %31 = sbr.rel (0) target = $region13
    $region12: #{tpu_custom_call.1} parent=1 // pred_region
      _
    $region13: #{tpu_custom_call.1} parent=1 // pred_fallthru
      _
    // Predicated region
    $region14: #{tpu_custom_call.1} parent=1 // pred_check
      _
    $region15: #{tpu_custom_call.1} parent=1 // pred_check_branch
      %33 = sbr.rel (0) target = $region17
    $region16: #{tpu_custom_call.1} parent=1 // pred_region
      _
    $region17: #{tpu_custom_call.1} parent=1 // pred_fallthru
      _
    %34 = vsyncpa [#allocation3], 1

</llo_original>
